<compile_context>
chip_gen: v5e
topology: v5e:2x2
jax: 0.10.0
libtpu: 0.0.40
codegen_flags: <defaults>
</compile_context>

<pallas_src>
import functools

import jax
import jax.numpy as jnp
from jax.experimental import pallas as pl
from jax.experimental.pallas import tpu as pltpu

_LANE = 128


def _round_up(a: int, m: int) -> int:
    return ((a + m - 1) // m) * m


def _fmix32(h):
    """murmur3 32-bit finalizer: bijective avalanche mix on uint32."""
    h = h ^ (h >> 16)
    h = h * jnp.uint32(0x85EBCA6B)
    h = h ^ (h >> 13)
    h = h * jnp.uint32(0xC2B2AE35)
    h = h ^ (h >> 16)
    return h


def _poisson_kernel(seed_ref, x_ref, o_ref, *, prob_scale):
    t_block, row_tile, lane = o_ref.shape
    r = pl.program_id(0)        # row-block index (outermost -> x fetched once)
    tb = pl.program_id(1)       # time-block index

    x = x_ref[...]                                            # (row_tile, lane) f32
    # Bernoulli probability, computed once per block (constant over time steps).
    p = jnp.clip(x * jnp.float32(prob_scale), 0.0, 1.0)
    # uint32 threshold: P(bits < thr) ~= p.  4294967040 is the largest float32
    # below 2**32; p == 1 saturates to spike prob 1 - ~6e-8 (vs exactly 1 in the
    # torch reference) which is negligible.  Padded lanes have p = 0 -> thr = 0
    # -> never spike.
    thr = (p * jnp.float32(4294967040.0)).astype(jnp.uint32)

    # Time-invariant per-element hash base: global element id mixed with seed.
    row_ids = jax.lax.broadcasted_iota(jnp.int32, (row_tile, lane), 0)
    lane_ids = jax.lax.broadcasted_iota(jnp.int32, (row_tile, lane), 1)
    elem = ((row_ids + r * row_tile) * lane + lane_ids).astype(jnp.uint32)
    seed_u = seed_ref[0].astype(jnp.uint32)
    base = _fmix32(elem ^ (seed_u * jnp.uint32(0x9E3779B1)))  # (row_tile, lane)

    # One lane-dense (row_tile, 128) slab of spikes per time step of the block.
    for t in range(t_block):  # static unroll, t_block <= 16
        tg = (tb * t_block + t).astype(jnp.uint32)            # global time step
        bits = _fmix32(base ^ (tg * jnp.uint32(0x85EBCA77)))
        o_ref[t] = (bits < thr).astype(o_ref.dtype)


def poisson_encode(x, seq_length, f_max=100.0, dt=0.001, seed=0):
    """Pallas TPU implementation of norse's poisson_encode."""
    orig_shape = tuple(x.shape)
    n = int(x.size)
    rows = pl.cdiv(n, _LANE)

    # Row tiling: keeps VMEM use bounded/size-independent; target 512 rows/tile.
    row_tile = min(_round_up(rows, 8), 512)
    rows_pad = _round_up(rows, row_tile)
    num_row_blocks = rows_pad // row_tile

    # Time blocking: several time steps per grid step to amortize grid overhead.
    t_block = min(int(seq_length), 16)
    seq_pad = _round_up(int(seq_length), t_block)
    num_t_blocks = seq_pad // t_block

    xf = x.reshape(-1).astype(jnp.float32)
    pad = rows_pad * _LANE - n
    if pad:
        xf = jnp.pad(xf, (0, pad))          # padded tail: p = 0 -> no spikes
    xf = xf.reshape(rows_pad, _LANE)

    seed_arr = jnp.array([seed], dtype=jnp.int32)
    kernel = functools.partial(_poisson_kernel,
                               prob_scale=float(f_max) * float(dt))

    out = pl.pallas_call(
        kernel,
        out_shape=jax.ShapeDtypeStruct((seq_pad, rows_pad, _LANE), jnp.float32),
        grid_spec=pltpu.PrefetchScalarGridSpec(
            num_scalar_prefetch=1,
            # Row blocks outermost: x tile fetched once per row block, reused
            # for every time block.
            grid=(num_row_blocks, num_t_blocks),
            in_specs=[pl.BlockSpec((row_tile, _LANE),
                                   lambda r, t, seed: (r, 0))],
            out_specs=pl.BlockSpec((t_block, row_tile, _LANE),
                                   lambda r, t, seed: (t, r, 0)),
        ),
        compiler_params=pltpu.CompilerParams(
            # Stateless counter-based RNG -> every grid point independent; both
            # axes can shard across TensorCores (v7x megacore).
            dimension_semantics=("parallel", "parallel"),
        ),
    )(seed_arr, xf)

    out = out[:seq_length].reshape(seq_length, rows_pad * _LANE)[:, :n]
    return out.reshape((seq_length,) + orig_shape)


class PoissonEncoder:
    """Pallas TPU equivalent of norse.torch.module.encode.PoissonEncoder."""

    def __init__(self, seq_length: int, f_max: float = 100.0, dt: float = 0.001):
        self.seq_length = seq_length
        self.f_max = f_max
        self.dt = dt

    def __call__(self, x, seed=0):
        return poisson_encode(x, self.seq_length, f_max=self.f_max,
                              dt=self.dt, seed=seed)


if __name__ == "__main__":
    key = jax.random.PRNGKey(0)
    # PoissonEncoder assumes input values in [0, 1]; NCHW-style input.
    x = jax.random.uniform(key, (2, 4, 16, 16), dtype=jnp.float32)

    enc = PoissonEncoder(seq_length=8, f_max=100.0, dt=0.001)
    out = enc(x, seed=1234)
    out = jax.block_until_ready(out)

    # Sanity checks on semantics.
    assert out.shape == (8, 2, 4, 16, 16), out.shape
    assert out.dtype == jnp.float32
    vals = jnp.unique(out)
    assert bool(jnp.all(jnp.isin(vals, jnp.array([0.0, 1.0])))), vals
    # Mean spike rate should track E[f_max * dt * x] (loose statistical check
    # over 8 * 2048 Bernoulli draws).
    expected = float(jnp.clip(x * 0.1, 0.0, 1.0).mean())
    got = float(out.mean())
    assert abs(got - expected) < 0.02, (got, expected)

    print("KERNEL_OK")
</pallas_src>

<mosaic_0001>
module attributes {stable_mosaic.version = 11 : i64} {
  func.func @_poisson_kernel(%arg0: i32, %arg1: i32, %arg2: memref<1xi32, #tpu.memory_space<smem>>, %arg3: memref<16x128xf32, #tpu.memory_space<vmem>>, %arg4: memref<8x16x128xf32, #tpu.memory_space<vmem>>) attributes {dimension_semantics = [#tpu.dimension_semantics<parallel>, #tpu.dimension_semantics<parallel>], iteration_bounds = array<i64: 1, 1>, scalar_prefetch = 1 : i64, scratch_operands = 0 : i64, tpu.core_type = #tpu.core_type<tc>, window_params = [{transform_indices = @transform_0, window_bounds = array<i64: 16, 128>}, {transform_indices = @transform_1, window_bounds = array<i64: 8, 16, 128>}]} {
    %c0 = arith.constant 0 : index
    %c0_0 = arith.constant 0 : index
    %0 = vector.load %arg3[%c0, %c0_0] : memref<16x128xf32, #tpu.memory_space<vmem>>, vector<16x128xf32>
    %cst = arith.constant 1.000000e-01 : f32
    %1 = vector.broadcast %cst : f32 to vector<16x128xf32>
    %2 = arith.mulf %0, %1 : vector<16x128xf32>
    %cst_1 = arith.constant 0.000000e+00 : f32
    %cst_2 = arith.constant 1.000000e+00 : f32
    %3 = vector.broadcast %cst_1 : f32 to vector<16x128xf32>
    %4 = arith.maximumf %3, %2 : vector<16x128xf32>
    %5 = vector.broadcast %cst_2 : f32 to vector<16x128xf32>
    %6 = arith.minimumf %5, %4 : vector<16x128xf32>
    %cst_3 = arith.constant 4.29496704E+9 : f32
    %7 = vector.broadcast %cst_3 : f32 to vector<16x128xf32>
    %8 = arith.mulf %6, %7 : vector<16x128xf32>
    %9 = arith.fptoui %8 : vector<16x128xf32> to vector<16x128xi32>
    %10 = tpu.iota {dimensions = array<i32: 0>} : vector<16x128xi32>
    %11 = tpu.iota {dimensions = array<i32: 1>} : vector<16x128xi32>
    %c16_i32 = arith.constant 16 : i32
    %12 = arith.muli %arg0, %c16_i32 : i32
    %13 = vector.broadcast %12 : i32 to vector<16x128xi32>
    %14 = arith.addi %10, %13 : vector<16x128xi32>
    %c128_i32 = arith.constant 128 : i32
    %15 = vector.broadcast %c128_i32 : i32 to vector<16x128xi32>
    %16 = arith.muli %14, %15 : vector<16x128xi32>
    %17 = arith.addi %16, %11 : vector<16x128xi32>
    %c0_4 = arith.constant 0 : index
    %18 = memref.load %arg2[%c0_4] : memref<1xi32, #tpu.memory_space<smem>>
    %c-1640531535_i32 = arith.constant -1640531535 : i32
    %19 = arith.muli %18, %c-1640531535_i32 : i32
    %20 = vector.broadcast %19 : i32 to vector<16x128xi32>
    %21 = arith.xori %17, %20 : vector<16x128xi32>
    %c16_i32_5 = arith.constant 16 : i32
    %22 = vector.broadcast %c16_i32_5 : i32 to vector<16x128xi32>
    %23 = arith.shrui %21, %22 : vector<16x128xi32>
    %24 = arith.xori %21, %23 : vector<16x128xi32>
    %c-2048144789_i32 = arith.constant -2048144789 : i32
    %25 = vector.broadcast %c-2048144789_i32 : i32 to vector<16x128xi32>
    %26 = arith.muli %24, %25 : vector<16x128xi32>
    %c13_i32 = arith.constant 13 : i32
    %27 = vector.broadcast %c13_i32 : i32 to vector<16x128xi32>
    %28 = arith.shrui %26, %27 : vector<16x128xi32>
    %29 = arith.xori %26, %28 : vector<16x128xi32>
    %c-1028477387_i32 = arith.constant -1028477387 : i32
    %30 = vector.broadcast %c-1028477387_i32 : i32 to vector<16x128xi32>
    %31 = arith.muli %29, %30 : vector<16x128xi32>
    %c16_i32_6 = arith.constant 16 : i32
    %32 = vector.broadcast %c16_i32_6 : i32 to vector<16x128xi32>
    %33 = arith.shrui %31, %32 : vector<16x128xi32>
    %34 = arith.xori %31, %33 : vector<16x128xi32>
    %c8_i32 = arith.constant 8 : i32
    %35 = arith.muli %arg1, %c8_i32 : i32
    %c0_i32 = arith.constant 0 : i32
    %36 = arith.addi %35, %c0_i32 : i32
    %c-2048144777_i32 = arith.constant -2048144777 : i32
    %37 = arith.muli %36, %c-2048144777_i32 : i32
    %38 = vector.broadcast %37 : i32 to vector<16x128xi32>
    %39 = arith.xori %34, %38 : vector<16x128xi32>
    %c16_i32_7 = arith.constant 16 : i32
    %40 = vector.broadcast %c16_i32_7 : i32 to vector<16x128xi32>
    %41 = arith.shrui %39, %40 : vector<16x128xi32>
    %42 = arith.xori %39, %41 : vector<16x128xi32>
    %c-2048144789_i32_8 = arith.constant -2048144789 : i32
    %43 = vector.broadcast %c-2048144789_i32_8 : i32 to vector<16x128xi32>
    %44 = arith.muli %42, %43 : vector<16x128xi32>
    %c13_i32_9 = arith.constant 13 : i32
    %45 = vector.broadcast %c13_i32_9 : i32 to vector<16x128xi32>
    %46 = arith.shrui %44, %45 : vector<16x128xi32>
    %47 = arith.xori %44, %46 : vector<16x128xi32>
    %c-1028477387_i32_10 = arith.constant -1028477387 : i32
    %48 = vector.broadcast %c-1028477387_i32_10 : i32 to vector<16x128xi32>
    %49 = arith.muli %47, %48 : vector<16x128xi32>
    %c16_i32_11 = arith.constant 16 : i32
    %50 = vector.broadcast %c16_i32_11 : i32 to vector<16x128xi32>
    %51 = arith.shrui %49, %50 : vector<16x128xi32>
    %52 = arith.xori %49, %51 : vector<16x128xi32>
    %53 = arith.cmpi ult, %52, %9 : vector<16x128xi32>
    %54 = arith.extui %53 : vector<16x128xi1> to vector<16x128xi32>
    %55 = arith.sitofp %54 : vector<16x128xi32> to vector<16x128xf32>
    %c0_12 = arith.constant 0 : index
    %c0_13 = arith.constant 0 : index
    %c0_14 = arith.constant 0 : index
    %56 = vector.load %arg4[%c0_12, %c0_13, %c0_14] : memref<8x16x128xf32, #tpu.memory_space<vmem>>, vector<1x16x128xf32>
    %57 = vector.shape_cast %56 : vector<1x16x128xf32> to vector<16x128xf32>
    %58 = vector.shape_cast %55 : vector<16x128xf32> to vector<1x16x128xf32>
    tpu.vector_store %arg4[%c0_12, %c0_13, %c0_14], %58 {strides = array<i32>} : memref<8x16x128xf32, #tpu.memory_space<vmem>>, vector<1x16x128xf32>,
    %c8_i32_15 = arith.constant 8 : i32
    %59 = arith.muli %arg1, %c8_i32_15 : i32
    %c1_i32 = arith.constant 1 : i32
    %60 = arith.addi %59, %c1_i32 : i32
    %c-2048144777_i32_16 = arith.constant -2048144777 : i32
    %61 = arith.muli %60, %c-2048144777_i32_16 : i32
    %62 = vector.broadcast %61 : i32 to vector<16x128xi32>
    %63 = arith.xori %34, %62 : vector<16x128xi32>
    %c16_i32_17 = arith.constant 16 : i32
    %64 = vector.broadcast %c16_i32_17 : i32 to vector<16x128xi32>
    %65 = arith.shrui %63, %64 : vector<16x128xi32>
    %66 = arith.xori %63, %65 : vector<16x128xi32>
    %c-2048144789_i32_18 = arith.constant -2048144789 : i32
    %67 = vector.broadcast %c-2048144789_i32_18 : i32 to vector<16x128xi32>
    %68 = arith.muli %66, %67 : vector<16x128xi32>
    %c13_i32_19 = arith.constant 13 : i32
    %69 = vector.broadcast %c13_i32_19 : i32 to vector<16x128xi32>
    %70 = arith.shrui %68, %69 : vector<16x128xi32>
    %71 = arith.xori %68, %70 : vector<16x128xi32>
    %c-1028477387_i32_20 = arith.constant -1028477387 : i32
    %72 = vector.broadcast %c-1028477387_i32_20 : i32 to vector<16x128xi32>
    %73 = arith.muli %71, %72 : vector<16x128xi32>
    %c16_i32_21 = arith.constant 16 : i32
    %74 = vector.broadcast %c16_i32_21 : i32 to vector<16x128xi32>
    %75 = arith.shrui %73, %74 : vector<16x128xi32>
    %76 = arith.xori %73, %75 : vector<16x128xi32>
    %77 = arith.cmpi ult, %76, %9 : vector<16x128xi32>
    %78 = arith.extui %77 : vector<16x128xi1> to vector<16x128xi32>
    %79 = arith.sitofp %78 : vector<16x128xi32> to vector<16x128xf32>
    %c1 = arith.constant 1 : index
    %c0_22 = arith.constant 0 : index
    %c0_23 = arith.constant 0 : index
    %80 = vector.load %arg4[%c1, %c0_22, %c0_23] : memref<8x16x128xf32, #tpu.memory_space<vmem>>, vector<1x16x128xf32>
    %81 = vector.shape_cast %80 : vector<1x16x128xf32> to vector<16x128xf32>
    %82 = vector.shape_cast %79 : vector<16x128xf32> to vector<1x16x128xf32>
    tpu.vector_store %arg4[%c1, %c0_22, %c0_23], %82 {strides = array<i32>} : memref<8x16x128xf32, #tpu.memory_space<vmem>>, vector<1x16x128xf32>,
    %c8_i32_24 = arith.constant 8 : i32
    %83 = arith.muli %arg1, %c8_i32_24 : i32
    %c2_i32 = arith.constant 2 : i32
    %84 = arith.addi %83, %c2_i32 : i32
    %c-2048144777_i32_25 = arith.constant -2048144777 : i32
    %85 = arith.muli %84, %c-2048144777_i32_25 : i32
    %86 = vector.broadcast %85 : i32 to vector<16x128xi32>
    %87 = arith.xori %34, %86 : vector<16x128xi32>
    %c16_i32_26 = arith.constant 16 : i32
    %88 = vector.broadcast %c16_i32_26 : i32 to vector<16x128xi32>
    %89 = arith.shrui %87, %88 : vector<16x128xi32>
    %90 = arith.xori %87, %89 : vector<16x128xi32>
    %c-2048144789_i32_27 = arith.constant -2048144789 : i32
    %91 = vector.broadcast %c-2048144789_i32_27 : i32 to vector<16x128xi32>
    %92 = arith.muli %90, %91 : vector<16x128xi32>
    %c13_i32_28 = arith.constant 13 : i32
    %93 = vector.broadcast %c13_i32_28 : i32 to vector<16x128xi32>
    %94 = arith.shrui %92, %93 : vector<16x128xi32>
    %95 = arith.xori %92, %94 : vector<16x128xi32>
    %c-1028477387_i32_29 = arith.constant -1028477387 : i32
    %96 = vector.broadcast %c-1028477387_i32_29 : i32 to vector<16x128xi32>
    %97 = arith.muli %95, %96 : vector<16x128xi32>
    %c16_i32_30 = arith.constant 16 : i32
    %98 = vector.broadcast %c16_i32_30 : i32 to vector<16x128xi32>
    %99 = arith.shrui %97, %98 : vector<16x128xi32>
    %100 = arith.xori %97, %99 : vector<16x128xi32>
    %101 = arith.cmpi ult, %100, %9 : vector<16x128xi32>
    %102 = arith.extui %101 : vector<16x128xi1> to vector<16x128xi32>
    %103 = arith.sitofp %102 : vector<16x128xi32> to vector<16x128xf32>
    %c2 = arith.constant 2 : index
    %c0_31 = arith.constant 0 : index
    %c0_32 = arith.constant 0 : index
    %104 = vector.load %arg4[%c2, %c0_31, %c0_32] : memref<8x16x128xf32, #tpu.memory_space<vmem>>, vector<1x16x128xf32>
    %105 = vector.shape_cast %104 : vector<1x16x128xf32> to vector<16x128xf32>
    %106 = vector.shape_cast %103 : vector<16x128xf32> to vector<1x16x128xf32>
    tpu.vector_store %arg4[%c2, %c0_31, %c0_32], %106 {strides = array<i32>} : memref<8x16x128xf32, #tpu.memory_space<vmem>>, vector<1x16x128xf32>,
    %c8_i32_33 = arith.constant 8 : i32
    %107 = arith.muli %arg1, %c8_i32_33 : i32
    %c3_i32 = arith.constant 3 : i32
    %108 = arith.addi %107, %c3_i32 : i32
    %c-2048144777_i32_34 = arith.constant -2048144777 : i32
    %109 = arith.muli %108, %c-2048144777_i32_34 : i32
    %110 = vector.broadcast %109 : i32 to vector<16x128xi32>
    %111 = arith.xori %34, %110 : vector<16x128xi32>
    %c16_i32_35 = arith.constant 16 : i32
    %112 = vector.broadcast %c16_i32_35 : i32 to vector<16x128xi32>
    %113 = arith.shrui %111, %112 : vector<16x128xi32>
    %114 = arith.xori %111, %113 : vector<16x128xi32>
    %c-2048144789_i32_36 = arith.constant -2048144789 : i32
    %115 = vector.broadcast %c-2048144789_i32_36 : i32 to vector<16x128xi32>
    %116 = arith.muli %114, %115 : vector<16x128xi32>
    %c13_i32_37 = arith.constant 13 : i32
    %117 = vector.broadcast %c13_i32_37 : i32 to vector<16x128xi32>
    %118 = arith.shrui %116, %117 : vector<16x128xi32>
    %119 = arith.xori %116, %118 : vector<16x128xi32>
    %c-1028477387_i32_38 = arith.constant -1028477387 : i32
    %120 = vector.broadcast %c-1028477387_i32_38 : i32 to vector<16x128xi32>
    %121 = arith.muli %119, %120 : vector<16x128xi32>
    %c16_i32_39 = arith.constant 16 : i32
    %122 = vector.broadcast %c16_i32_39 : i32 to vector<16x128xi32>
    %123 = arith.shrui %121, %122 : vector<16x128xi32>
    %124 = arith.xori %121, %123 : vector<16x128xi32>
    %125 = arith.cmpi ult, %124, %9 : vector<16x128xi32>
    %126 = arith.extui %125 : vector<16x128xi1> to vector<16x128xi32>
    %127 = arith.sitofp %126 : vector<16x128xi32> to vector<16x128xf32>
    %c3 = arith.constant 3 : index
    %c0_40 = arith.constant 0 : index
    %c0_41 = arith.constant 0 : index
    %128 = vector.load %arg4[%c3, %c0_40, %c0_41] : memref<8x16x128xf32, #tpu.memory_space<vmem>>, vector<1x16x128xf32>
    %129 = vector.shape_cast %128 : vector<1x16x128xf32> to vector<16x128xf32>
    %130 = vector.shape_cast %127 : vector<16x128xf32> to vector<1x16x128xf32>
    tpu.vector_store %arg4[%c3, %c0_40, %c0_41], %130 {strides = array<i32>} : memref<8x16x128xf32, #tpu.memory_space<vmem>>, vector<1x16x128xf32>,
    %c8_i32_42 = arith.constant 8 : i32
    %131 = arith.muli %arg1, %c8_i32_42 : i32
    %c4_i32 = arith.constant 4 : i32
    %132 = arith.addi %131, %c4_i32 : i32
    %c-2048144777_i32_43 = arith.constant -2048144777 : i32
    %133 = arith.muli %132, %c-2048144777_i32_43 : i32
    %134 = vector.broadcast %133 : i32 to vector<16x128xi32>
    %135 = arith.xori %34, %134 : vector<16x128xi32>
    %c16_i32_44 = arith.constant 16 : i32
    %136 = vector.broadcast %c16_i32_44 : i32 to vector<16x128xi32>
    %137 = arith.shrui %135, %136 : vector<16x128xi32>
    %138 = arith.xori %135, %137 : vector<16x128xi32>
    %c-2048144789_i32_45 = arith.constant -2048144789 : i32
    %139 = vector.broadcast %c-2048144789_i32_45 : i32 to vector<16x128xi32>
    %140 = arith.muli %138, %139 : vector<16x128xi32>
    %c13_i32_46 = arith.constant 13 : i32
    %141 = vector.broadcast %c13_i32_46 : i32 to vector<16x128xi32>
    %142 = arith.shrui %140, %141 : vector<16x128xi32>
    %143 = arith.xori %140, %142 : vector<16x128xi32>
    %c-1028477387_i32_47 = arith.constant -1028477387 : i32
    %144 = vector.broadcast %c-1028477387_i32_47 : i32 to vector<16x128xi32>
    %145 = arith.muli %143, %144 : vector<16x128xi32>
    %c16_i32_48 = arith.constant 16 : i32
    %146 = vector.broadcast %c16_i32_48 : i32 to vector<16x128xi32>
    %147 = arith.shrui %145, %146 : vector<16x128xi32>
    %148 = arith.xori %145, %147 : vector<16x128xi32>
    %149 = arith.cmpi ult, %148, %9 : vector<16x128xi32>
    %150 = arith.extui %149 : vector<16x128xi1> to vector<16x128xi32>
    %151 = arith.sitofp %150 : vector<16x128xi32> to vector<16x128xf32>
    %c4 = arith.constant 4 : index
    %c0_49 = arith.constant 0 : index
    %c0_50 = arith.constant 0 : index
    %152 = vector.load %arg4[%c4, %c0_49, %c0_50] : memref<8x16x128xf32, #tpu.memory_space<vmem>>, vector<1x16x128xf32>
    %153 = vector.shape_cast %152 : vector<1x16x128xf32> to vector<16x128xf32>
    %154 = vector.shape_cast %151 : vector<16x128xf32> to vector<1x16x128xf32>
    tpu.vector_store %arg4[%c4, %c0_49, %c0_50], %154 {strides = array<i32>} : memref<8x16x128xf32, #tpu.memory_space<vmem>>, vector<1x16x128xf32>,
    %c8_i32_51 = arith.constant 8 : i32
    %155 = arith.muli %arg1, %c8_i32_51 : i32
    %c5_i32 = arith.constant 5 : i32
    %156 = arith.addi %155, %c5_i32 : i32
    %c-2048144777_i32_52 = arith.constant -2048144777 : i32
    %157 = arith.muli %156, %c-2048144777_i32_52 : i32
    %158 = vector.broadcast %157 : i32 to vector<16x128xi32>
    %159 = arith.xori %34, %158 : vector<16x128xi32>
    %c16_i32_53 = arith.constant 16 : i32
    %160 = vector.broadcast %c16_i32_53 : i32 to vector<16x128xi32>
    %161 = arith.shrui %159, %160 : vector<16x128xi32>
    %162 = arith.xori %159, %161 : vector<16x128xi32>
    %c-2048144789_i32_54 = arith.constant -2048144789 : i32
    %163 = vector.broadcast %c-2048144789_i32_54 : i32 to vector<16x128xi32>
    %164 = arith.muli %162, %163 : vector<16x128xi32>
    %c13_i32_55 = arith.constant 13 : i32
    %165 = vector.broadcast %c13_i32_55 : i32 to vector<16x128xi32>
    %166 = arith.shrui %164, %165 : vector<16x128xi32>
    %167 = arith.xori %164, %166 : vector<16x128xi32>
    %c-1028477387_i32_56 = arith.constant -1028477387 : i32
    %168 = vector.broadcast %c-1028477387_i32_56 : i32 to vector<16x128xi32>
    %169 = arith.muli %167, %168 : vector<16x128xi32>
    %c16_i32_57 = arith.constant 16 : i32
    %170 = vector.broadcast %c16_i32_57 : i32 to vector<16x128xi32>
    %171 = arith.shrui %169, %170 : vector<16x128xi32>
    %172 = arith.xori %169, %171 : vector<16x128xi32>
    %173 = arith.cmpi ult, %172, %9 : vector<16x128xi32>
    %174 = arith.extui %173 : vector<16x128xi1> to vector<16x128xi32>
    %175 = arith.sitofp %174 : vector<16x128xi32> to vector<16x128xf32>
    %c5 = arith.constant 5 : index
    %c0_58 = arith.constant 0 : index
    %c0_59 = arith.constant 0 : index
    %176 = vector.load %arg4[%c5, %c0_58, %c0_59] : memref<8x16x128xf32, #tpu.memory_space<vmem>>, vector<1x16x128xf32>
    %177 = vector.shape_cast %176 : vector<1x16x128xf32> to vector<16x128xf32>
    %178 = vector.shape_cast %175 : vector<16x128xf32> to vector<1x16x128xf32>
    tpu.vector_store %arg4[%c5, %c0_58, %c0_59], %178 {strides = array<i32>} : memref<8x16x128xf32, #tpu.memory_space<vmem>>, vector<1x16x128xf32>,
    %c8_i32_60 = arith.constant 8 : i32
    %179 = arith.muli %arg1, %c8_i32_60 : i32
    %c6_i32 = arith.constant 6 : i32
    %180 = arith.addi %179, %c6_i32 : i32
    %c-2048144777_i32_61 = arith.constant -2048144777 : i32
    %181 = arith.muli %180, %c-2048144777_i32_61 : i32
    %182 = vector.broadcast %181 : i32 to vector<16x128xi32>
    %183 = arith.xori %34, %182 : vector<16x128xi32>
    %c16_i32_62 = arith.constant 16 : i32
    %184 = vector.broadcast %c16_i32_62 : i32 to vector<16x128xi32>
    %185 = arith.shrui %183, %184 : vector<16x128xi32>
    %186 = arith.xori %183, %185 : vector<16x128xi32>
    %c-2048144789_i32_63 = arith.constant -2048144789 : i32
    %187 = vector.broadcast %c-2048144789_i32_63 : i32 to vector<16x128xi32>
    %188 = arith.muli %186, %187 : vector<16x128xi32>
    %c13_i32_64 = arith.constant 13 : i32
    %189 = vector.broadcast %c13_i32_64 : i32 to vector<16x128xi32>
    %190 = arith.shrui %188, %189 : vector<16x128xi32>
    %191 = arith.xori %188, %190 : vector<16x128xi32>
    %c-1028477387_i32_65 = arith.constant -1028477387 : i32
    %192 = vector.broadcast %c-1028477387_i32_65 : i32 to vector<16x128xi32>
    %193 = arith.muli %191, %192 : vector<16x128xi32>
    %c16_i32_66 = arith.constant 16 : i32
    %194 = vector.broadcast %c16_i32_66 : i32 to vector<16x128xi32>
    %195 = arith.shrui %193, %194 : vector<16x128xi32>
    %196 = arith.xori %193, %195 : vector<16x128xi32>
    %197 = arith.cmpi ult, %196, %9 : vector<16x128xi32>
    %198 = arith.extui %197 : vector<16x128xi1> to vector<16x128xi32>
    %199 = arith.sitofp %198 : vector<16x128xi32> to vector<16x128xf32>
    %c6 = arith.constant 6 : index
    %c0_67 = arith.constant 0 : index
    %c0_68 = arith.constant 0 : index
    %200 = vector.load %arg4[%c6, %c0_67, %c0_68] : memref<8x16x128xf32, #tpu.memory_space<vmem>>, vector<1x16x128xf32>
    %201 = vector.shape_cast %200 : vector<1x16x128xf32> to vector<16x128xf32>
    %202 = vector.shape_cast %199 : vector<16x128xf32> to vector<1x16x128xf32>
    tpu.vector_store %arg4[%c6, %c0_67, %c0_68], %202 {strides = array<i32>} : memref<8x16x128xf32, #tpu.memory_space<vmem>>, vector<1x16x128xf32>,
    %c8_i32_69 = arith.constant 8 : i32
    %203 = arith.muli %arg1, %c8_i32_69 : i32
    %c7_i32 = arith.constant 7 : i32
    %204 = arith.addi %203, %c7_i32 : i32
    %c-2048144777_i32_70 = arith.constant -2048144777 : i32
    %205 = arith.muli %204, %c-2048144777_i32_70 : i32
    %206 = vector.broadcast %205 : i32 to vector<16x128xi32>
    %207 = arith.xori %34, %206 : vector<16x128xi32>
    %c16_i32_71 = arith.constant 16 : i32
    %208 = vector.broadcast %c16_i32_71 : i32 to vector<16x128xi32>
    %209 = arith.shrui %207, %208 : vector<16x128xi32>
    %210 = arith.xori %207, %209 : vector<16x128xi32>
    %c-2048144789_i32_72 = arith.constant -2048144789 : i32
    %211 = vector.broadcast %c-2048144789_i32_72 : i32 to vector<16x128xi32>
    %212 = arith.muli %210, %211 : vector<16x128xi32>
    %c13_i32_73 = arith.constant 13 : i32
    %213 = vector.broadcast %c13_i32_73 : i32 to vector<16x128xi32>
    %214 = arith.shrui %212, %213 : vector<16x128xi32>
    %215 = arith.xori %212, %214 : vector<16x128xi32>
    %c-1028477387_i32_74 = arith.constant -1028477387 : i32
    %216 = vector.broadcast %c-1028477387_i32_74 : i32 to vector<16x128xi32>
    %217 = arith.muli %215, %216 : vector<16x128xi32>
    %c16_i32_75 = arith.constant 16 : i32
    %218 = vector.broadcast %c16_i32_75 : i32 to vector<16x128xi32>
    %219 = arith.shrui %217, %218 : vector<16x128xi32>
    %220 = arith.xori %217, %219 : vector<16x128xi32>
    %221 = arith.cmpi ult, %220, %9 : vector<16x128xi32>
    %222 = arith.extui %221 : vector<16x128xi1> to vector<16x128xi32>
    %223 = arith.sitofp %222 : vector<16x128xi32> to vector<16x128xf32>
    %c7 = arith.constant 7 : index
    %c0_76 = arith.constant 0 : index
    %c0_77 = arith.constant 0 : index
    %224 = vector.load %arg4[%c7, %c0_76, %c0_77] : memref<8x16x128xf32, #tpu.memory_space<vmem>>, vector<1x16x128xf32>
    %225 = vector.shape_cast %224 : vector<1x16x128xf32> to vector<16x128xf32>
    %226 = vector.shape_cast %223 : vector<16x128xf32> to vector<1x16x128xf32>
    tpu.vector_store %arg4[%c7, %c0_76, %c0_77], %226 {strides = array<i32>} : memref<8x16x128xf32, #tpu.memory_space<vmem>>, vector<1x16x128xf32>,
    return
  }
  func.func @transform_0(%arg0: i32, %arg1: i32, %arg2: memref<1xi32, #tpu.memory_space<smem>>) -> (i32, i32) {
    %c0_i32 = arith.constant 0 : i32
    %c0_i32_0 = arith.constant 0 : i32
    return %arg0, %c0_i32 : i32, i32
  }
  func.func @transform_1(%arg0: i32, %arg1: i32, %arg2: memref<1xi32, #tpu.memory_space<smem>>) -> (i32, i32, i32) {
    %c0_i32 = arith.constant 0 : i32
    %c0_i32_0 = arith.constant 0 : i32
    return %arg1, %arg0, %c0_i32 : i32, i32, i32
  }
}

</mosaic_0001>

<llo_original>
// kernel: tpu_custom_call.1
$region0: #{tpu_custom_call.1}
  #allocation0 [shape = 'u32[]', space=smem, size = 0x4, offset = 0x4, fixed_abs, tag = 'smem constant byte address 0x4 - core index']
  #allocation1 [shape = 'u32[72,128]{1,0:T(1,128)}', space=vmem, size = 0x9000, scoped, tag = 'internal scratch']
  #allocation2 [shape = 's32[1]{0}', space=sflag, size = 0x4, scoped, tag = 'scoped memory for tpu_custom_call.1']
  #allocation3 [shape = 's32[1]{0:T(128)S(6)}', space=smem, size = 0x200, scoped, tag = 'prefetched SMEM operand 0']
  %s0 = inlined_call_operand.<no memory space> [shape: s32[1], index: 0, kind: input, shape index: {}]
  %s1 = inlined_call_operand.hbm [shape: f32[16,128], index: 1, kind: input, shape index: {}]
  %s2 = inlined_call_operand.hbm [shape: f32[8,16,128], index: 2, kind: output, shape index: {}]
  %s3 = sld [smem:[#allocation0]]
  $region18: #{tpu_custom_call.1} parent=0
    _
  %s5 = ssub.s32 1, %s3
  %s6 = scalar_select 0, %s5, %s3
  %7 = sst [smem:[#allocation3]] %s0
  $region1: #{tpu_custom_call.1} parent=0
    #allocation4 [shape = 'u8[8192]{0}', space=vmem, size = 0x2000, scoped, tag = 'input window, operand 1, single buffered']
    #allocation5 [shape = 's32[1]{0}', space=sflag, size = 0x4, scoped, tag = 'scoped memory for tpu_custom_call.1']
    #allocation6 [shape = 's32[1]{0}', space=sflag, size = 0x4, scoped, tag = 'scoped memory for tpu_custom_call.1']
    #allocation7 [shape = 'u8[65536]{0}', space=vmem, size = 0x10000, scoped, tag = 'output window, operand 0, single buffered']
    %8 = vsyncpa [#allocation5], 0
    %9 = vsyncpa [#allocation6], 0
    // Predicated region
    $region2: #{tpu_custom_call.1} parent=1 // pred_check
      _
    $region3: #{tpu_custom_call.1} parent=1 // pred_check_branch
      %11 = sbr.rel (0) target = $region5
    $region4: #{tpu_custom_call.1} parent=1 // pred_region
      %13 = vsyncadd [#allocation5], 0
      %s14 = sshll.u32 %s1, 4
      %s15 = int_to_ptr.hbm [resolvable:$true] %s14
      %s16 = sshll.u32 [#allocation4], 4
      %s17 = int_to_ptr.vmem [resolvable:$true] %s16
      %22 = dma.hbm_to_vmem [thread:$0]  %s15, 256, %s17, [#allocation5], 128, 128, 8
    $region5: #{tpu_custom_call.1} parent=1 // pred_fallthru
      _
    // Predicated region
    $region6: #{tpu_custom_call.1} parent=1 // pred_check
      _
    $region7: #{tpu_custom_call.1} parent=1 // pred_check_branch
      %24 = sbr.rel (0) target = $region9
    $region8: #{tpu_custom_call.1} parent=1 // pred_region
      %26 = dma.done [#allocation5], 256
    $region9: #{tpu_custom_call.1} parent=1 // pred_fallthru
      _
    %v27 = vld [vmem:[#allocation4] sm:$0xff]
    %v28 = vld [vmem:[#allocation4 + $0x8] sm:$0xff]
    %v29 = vmul.f32 %v27, 0.1
    %v30 = vmul.f32 %v28, 0.1
    %v31 = vmax.f32 %v29, 0.0
    %v32 = vmax.f32 %v30, 0.0
    %v33 = vmin.f32 %v31, 1.0
    %v34 = vmin.f32 %v32, 1.0
    %v35 = vmul.f32 %v33, 4.294967e+09
    %v36 = vmul.f32 %v34, 4.294967e+09
    %v37 = vmax.f32 %v35, 0.0
    %v38 = vsub.f32 %v37, 2.1474836e+09
    %vm39 = vcmp.lt.s32.totalorder %v38, 0
    %v40 = vceil.f32 %v38
    %v41 = vfloor.f32 %v38
    %v42 = vsel %vm39, %v40, %v41
    %v43 = vcvt.f32.s32 %v42
    %v44 = vadd.s32 2147483648, %v43
    %vm45 = vcmp.lt.s32.totalorder %v37, 0
    %v46 = vceil.f32 %v37
    %v47 = vfloor.f32 %v37
    %v48 = vsel %vm45, %v46, %v47
    %v49 = vcvt.f32.s32 %v48
    %vm50 = vcmp.ge.f32.partialorder %v37, 2.1474836e+09
    %v51 = vsel %vm50, %v44, %v49
    %v52 = vmax.f32 %v36, 0.0
    %v53 = vsub.f32 %v52, 2.1474836e+09
    %vm54 = vcmp.lt.s32.totalorder %v53, 0
    %v55 = vceil.f32 %v53
    %v56 = vfloor.f32 %v53
    %v57 = vsel %vm54, %v55, %v56
    %v58 = vcvt.f32.s32 %v57
    %v59 = vadd.s32 2147483648, %v58
    %vm60 = vcmp.lt.s32.totalorder %v52, 0
    %v61 = vceil.f32 %v52
    %v62 = vfloor.f32 %v52
    %v63 = vsel %vm60, %v61, %v62
    %v64 = vcvt.f32.s32 %v63
    %vm65 = vcmp.ge.f32.partialorder %v52, 2.1474836e+09
    %v66 = vsel %vm65, %v59, %v64
    %v67 = vlaneseq
    %v68 = vshrl.u32 %v67, 7
    %v69 = vadd.s32 %v68, 8
    %v70 = vlaneseq
    %v71 = vand.u32 %v70, 127
    %s72 = smul.u32 0, 16
    %v73 = vstv %s72
    %v74 = vadd.s32 %v68, %v73
    %v75 = vadd.s32 %v69, %v73
    %v76 = vmul.u32 %v74, 128
    %v77 = vmul.u32 %v75, 128
    %v78 = vadd.s32 %v76, %v71
    %v79 = vadd.s32 %v77, %v71
    %s80 = sld [smem:[#allocation3]]
    %s81 = smul.u32 %s80, 2654435761
    %v82 = vstv %s81
    %v83 = vxor.u32 %v78, %v82
    %v84 = vxor.u32 %v79, %v82
    %v85 = vshrl.u32 %v83, 16
    %v86 = vshrl.u32 %v84, 16
    %v87 = vxor.u32 %v83, %v85
    %v88 = vxor.u32 %v84, %v86
    %v89 = vmul.u32 %v87, 2246822507
    %v90 = vmul.u32 %v88, 2246822507
    %v91 = vshrl.u32 %v89, 13
    %v92 = vshrl.u32 %v90, 13
    %v93 = vxor.u32 %v89, %v91
    %v94 = vxor.u32 %v90, %v92
    %v95 = vmul.u32 %v93, 3266489909
    %v96 = vmul.u32 %v94, 3266489909
    %v97 = vshrl.u32 %v95, 16
    %v98 = vshrl.u32 %v96, 16
    %v99 = vxor.u32 %v95, %v97
    %v100 = vxor.u32 %v96, %v98
    %s101 = smul.u32 0, 794710968
    %v102 = vstv %s101
    %v103 = vxor.u32 %v99, %v102
    %v104 = vxor.u32 %v100, %v102
    %v105 = vshrl.u32 %v103, 16
    %v106 = vshrl.u32 %v104, 16
    %v107 = vxor.u32 %v103, %v105
    %v108 = vxor.u32 %v104, %v106
    %v109 = vmul.u32 %v107, 2246822507
    %v110 = vmul.u32 %v108, 2246822507
    %v111 = vshrl.u32 %v109, 13
    %v112 = vshrl.u32 %v110, 13
    %v113 = vxor.u32 %v109, %v111
    %v114 = vxor.u32 %v110, %v112
    %v115 = vmul.u32 %v113, 3266489909
    %v116 = vmul.u32 %v114, 3266489909
    %v117 = vshrl.u32 %v115, 16
    %v118 = vshrl.u32 %v116, 16
    %v119 = vxor.u32 %v115, %v117
    %v120 = vxor.u32 %v116, %v118
    %v121 = vadd.s32 %v119, 2147483648
    %v122 = vadd.s32 %v51, 2147483648
    %vm123 = vcmp.lt.s32.totalorder %v121, %v122
    %v124 = vadd.s32 %v120, 2147483648
    %v125 = vadd.s32 %v66, 2147483648
    %vm126 = vcmp.lt.s32.totalorder %v124, %v125
    %v127 = vsel %vm123, 1, 0
    %v128 = vsel %vm126, 1, 0
    %v129 = vcvt.s32.f32 %v127
    %v130 = vcvt.s32.f32 %v128
    %131 = vst [vmem:[#allocation7] sm:$0xff] %v129
    %132 = vst [vmem:[#allocation7 + $0x8] sm:$0xff] %v130
    %s133 = smul.u32 0, 8
    %s134 = sadd.s32 %s133, 1
    %s135 = smul.u32 %s134, 2246822519
    %v136 = vstv %s135
    %v137 = vxor.u32 %v99, %v136
    %v138 = vxor.u32 %v100, %v136
    %v139 = vshrl.u32 %v137, 16
    %v140 = vshrl.u32 %v138, 16
    %v141 = vxor.u32 %v137, %v139
    %v142 = vxor.u32 %v138, %v140
    %v143 = vmul.u32 %v141, 2246822507
    %v144 = vmul.u32 %v142, 2246822507
    %v145 = vshrl.u32 %v143, 13
    %v146 = vshrl.u32 %v144, 13
    %v147 = vxor.u32 %v143, %v145
    %v148 = vxor.u32 %v144, %v146
    %v149 = vmul.u32 %v147, 3266489909
    %v150 = vmul.u32 %v148, 3266489909
    %v151 = vshrl.u32 %v149, 16
    %v152 = vshrl.u32 %v150, 16
    %v153 = vxor.u32 %v149, %v151
    %v154 = vxor.u32 %v150, %v152
    %v155 = vadd.s32 %v153, 2147483648
    %v156 = vadd.s32 %v51, 2147483648
    %vm157 = vcmp.lt.s32.totalorder %v155, %v156
    %v158 = vadd.s32 %v154, 2147483648
    %v159 = vadd.s32 %v66, 2147483648
    %vm160 = vcmp.lt.s32.totalorder %v158, %v159
    %v161 = vsel %vm157, 1, 0
    %v162 = vsel %vm160, 1, 0
    %v163 = vcvt.s32.f32 %v161
    %v164 = vcvt.s32.f32 %v162
    %s165 = scalar_lea.vmem [#allocation7], 16
    %166 = vst [vmem:[%s165] sm:$0xff] %v163
    %167 = vst [vmem:[%s165 + $0x8] sm:$0xff] %v164
    %s168 = sadd.s32 %s133, 2
    %s169 = smul.u32 %s168, 2246822519
    %v170 = vstv %s169
    %v171 = vxor.u32 %v99, %v170
    %v172 = vxor.u32 %v100, %v170
    %v173 = vshrl.u32 %v171, 16
    %v174 = vshrl.u32 %v172, 16
    %v175 = vxor.u32 %v171, %v173
    %v176 = vxor.u32 %v172, %v174
    %v177 = vmul.u32 %v175, 2246822507
    %v178 = vmul.u32 %v176, 2246822507
    %v179 = vshrl.u32 %v177, 13
    %v180 = vshrl.u32 %v178, 13
    %v181 = vxor.u32 %v177, %v179
    %v182 = vxor.u32 %v178, %v180
    %v183 = vmul.u32 %v181, 3266489909
    %v184 = vmul.u32 %v182, 3266489909
    %v185 = vshrl.u32 %v183, 16
    %v186 = vshrl.u32 %v184, 16
    %v187 = vxor.u32 %v183, %v185
    %v188 = vxor.u32 %v184, %v186
    %v189 = vadd.s32 %v187, 2147483648
    %v190 = vadd.s32 %v51, 2147483648
    %vm191 = vcmp.lt.s32.totalorder %v189, %v190
    %v192 = vadd.s32 %v188, 2147483648
    %v193 = vadd.s32 %v66, 2147483648
    %vm194 = vcmp.lt.s32.totalorder %v192, %v193
    %v195 = vsel %vm191, 1, 0
    %v196 = vsel %vm194, 1, 0
    %v197 = vcvt.s32.f32 %v195
    %v198 = vcvt.s32.f32 %v196
    %s199 = scalar_lea.vmem [#allocation7], 32
    %200 = vst [vmem:[%s199] sm:$0xff] %v197
    %201 = vst [vmem:[%s199 + $0x8] sm:$0xff] %v198
    %s202 = sadd.s32 %s133, 3
    %s203 = smul.u32 %s202, 2246822519
    %v204 = vstv %s203
    %v205 = vxor.u32 %v99, %v204
    %v206 = vxor.u32 %v100, %v204
    %v207 = vshrl.u32 %v205, 16
    %v208 = vshrl.u32 %v206, 16
    %v209 = vxor.u32 %v205, %v207
    %v210 = vxor.u32 %v206, %v208
    %v211 = vmul.u32 %v209, 2246822507
    %v212 = vmul.u32 %v210, 2246822507
    %v213 = vshrl.u32 %v211, 13
    %v214 = vshrl.u32 %v212, 13
    %v215 = vxor.u32 %v211, %v213
    %v216 = vxor.u32 %v212, %v214
    %v217 = vmul.u32 %v215, 3266489909
    %v218 = vmul.u32 %v216, 3266489909
    %v219 = vshrl.u32 %v217, 16
    %v220 = vshrl.u32 %v218, 16
    %v221 = vxor.u32 %v217, %v219
    %v222 = vxor.u32 %v218, %v220
    %v223 = vadd.s32 %v221, 2147483648
    %v224 = vadd.s32 %v51, 2147483648
    %vm225 = vcmp.lt.s32.totalorder %v223, %v224
    %v226 = vadd.s32 %v222, 2147483648
    %v227 = vadd.s32 %v66, 2147483648
    %vm228 = vcmp.lt.s32.totalorder %v226, %v227
    %v229 = vsel %vm225, 1, 0
    %v230 = vsel %vm228, 1, 0
    %v231 = vcvt.s32.f32 %v229
    %v232 = vcvt.s32.f32 %v230
    %s233 = scalar_lea.vmem [#allocation7], 48
    %234 = vst [vmem:[%s233] sm:$0xff] %v231
    %235 = vst [vmem:[%s233 + $0x8] sm:$0xff] %v232
    %s236 = sadd.s32 %s133, 4
    %s237 = smul.u32 %s236, 2246822519
    %v238 = vstv %s237
    %v239 = vxor.u32 %v99, %v238
    %v240 = vxor.u32 %v100, %v238
    %v241 = vshrl.u32 %v239, 16
    %v242 = vshrl.u32 %v240, 16
    %v243 = vxor.u32 %v239, %v241
    %v244 = vxor.u32 %v240, %v242
    %v245 = vmul.u32 %v243, 2246822507
    %v246 = vmul.u32 %v244, 2246822507
    %v247 = vshrl.u32 %v245, 13
    %v248 = vshrl.u32 %v246, 13
    %v249 = vxor.u32 %v245, %v247
    %v250 = vxor.u32 %v246, %v248
    %v251 = vmul.u32 %v249, 3266489909
    %v252 = vmul.u32 %v250, 3266489909
    %v253 = vshrl.u32 %v251, 16
    %v254 = vshrl.u32 %v252, 16
    %v255 = vxor.u32 %v251, %v253
    %v256 = vxor.u32 %v252, %v254
    %v257 = vadd.s32 %v255, 2147483648
    %v258 = vadd.s32 %v51, 2147483648
    %vm259 = vcmp.lt.s32.totalorder %v257, %v258
    %v260 = vadd.s32 %v256, 2147483648
    %v261 = vadd.s32 %v66, 2147483648
    %vm262 = vcmp.lt.s32.totalorder %v260, %v261
    %v263 = vsel %vm259, 1, 0
    %v264 = vsel %vm262, 1, 0
    %v265 = vcvt.s32.f32 %v263
    %v266 = vcvt.s32.f32 %v264
    %s267 = scalar_lea.vmem [#allocation7], 64
    %268 = vst [vmem:[%s267] sm:$0xff] %v265
    %269 = vst [vmem:[%s267 + $0x8] sm:$0xff] %v266
    %s270 = sadd.s32 %s133, 5
    %s271 = smul.u32 %s270, 2246822519
    %v272 = vstv %s271
    %v273 = vxor.u32 %v99, %v272
    %v274 = vxor.u32 %v100, %v272
    %v275 = vshrl.u32 %v273, 16
    %v276 = vshrl.u32 %v274, 16
    %v277 = vxor.u32 %v273, %v275
    %v278 = vxor.u32 %v274, %v276
    %v279 = vmul.u32 %v277, 2246822507
    %v280 = vmul.u32 %v278, 2246822507
    %v281 = vshrl.u32 %v279, 13
    %v282 = vshrl.u32 %v280, 13
    %v283 = vxor.u32 %v279, %v281
    %v284 = vxor.u32 %v280, %v282
    %v285 = vmul.u32 %v283, 3266489909
    %v286 = vmul.u32 %v284, 3266489909
    %v287 = vshrl.u32 %v285, 16
    %v288 = vshrl.u32 %v286, 16
    %v289 = vxor.u32 %v285, %v287
    %v290 = vxor.u32 %v286, %v288
    %v291 = vadd.s32 %v289, 2147483648
    %v292 = vadd.s32 %v51, 2147483648
    %vm293 = vcmp.lt.s32.totalorder %v291, %v292
    %v294 = vadd.s32 %v290, 2147483648
    %v295 = vadd.s32 %v66, 2147483648
    %vm296 = vcmp.lt.s32.totalorder %v294, %v295
    %v297 = vsel %vm293, 1, 0
    %v298 = vsel %vm296, 1, 0
    %v299 = vcvt.s32.f32 %v297
    %v300 = vcvt.s32.f32 %v298
    %s301 = scalar_lea.vmem [#allocation7], 80
    %302 = vst [vmem:[%s301] sm:$0xff] %v299
    %303 = vst [vmem:[%s301 + $0x8] sm:$0xff] %v300
    %s304 = sadd.s32 %s133, 6
    %s305 = smul.u32 %s304, 2246822519
    %v306 = vstv %s305
    %v307 = vxor.u32 %v99, %v306
    %v308 = vxor.u32 %v100, %v306
    %v309 = vshrl.u32 %v307, 16
    %v310 = vshrl.u32 %v308, 16
    %v311 = vxor.u32 %v307, %v309
    %v312 = vxor.u32 %v308, %v310
    %v313 = vmul.u32 %v311, 2246822507
    %v314 = vmul.u32 %v312, 2246822507
    %v315 = vshrl.u32 %v313, 13
    %v316 = vshrl.u32 %v314, 13
    %v317 = vxor.u32 %v313, %v315
    %v318 = vxor.u32 %v314, %v316
    %v319 = vmul.u32 %v317, 3266489909
    %v320 = vmul.u32 %v318, 3266489909
    %v321 = vshrl.u32 %v319, 16
    %v322 = vshrl.u32 %v320, 16
    %v323 = vxor.u32 %v319, %v321
    %v324 = vxor.u32 %v320, %v322
    %v325 = vadd.s32 %v323, 2147483648
    %v326 = vadd.s32 %v51, 2147483648
    %vm327 = vcmp.lt.s32.totalorder %v325, %v326
    %v328 = vadd.s32 %v324, 2147483648
    %v329 = vadd.s32 %v66, 2147483648
    %vm330 = vcmp.lt.s32.totalorder %v328, %v329
    %v331 = vsel %vm327, 1, 0
    %v332 = vsel %vm330, 1, 0
    %v333 = vcvt.s32.f32 %v331
    %v334 = vcvt.s32.f32 %v332
    %s335 = scalar_lea.vmem [#allocation7], 96
    %336 = vst [vmem:[%s335] sm:$0xff] %v333
    %337 = vst [vmem:[%s335 + $0x8] sm:$0xff] %v334
    %s338 = sadd.s32 %s133, 7
    %s339 = smul.u32 %s338, 2246822519
    %v340 = vstv %s339
    %v341 = vxor.u32 %v99, %v340
    %v342 = vxor.u32 %v100, %v340
    %v343 = vshrl.u32 %v341, 16
    %v344 = vshrl.u32 %v342, 16
    %v345 = vxor.u32 %v341, %v343
    %v346 = vxor.u32 %v342, %v344
    %v347 = vmul.u32 %v345, 2246822507
    %v348 = vmul.u32 %v346, 2246822507
    %v349 = vshrl.u32 %v347, 13
    %v350 = vshrl.u32 %v348, 13
    %v351 = vxor.u32 %v347, %v349
    %v352 = vxor.u32 %v348, %v350
    %v353 = vmul.u32 %v351, 3266489909
    %v354 = vmul.u32 %v352, 3266489909
    %v355 = vshrl.u32 %v353, 16
    %v356 = vshrl.u32 %v354, 16
    %v357 = vxor.u32 %v353, %v355
    %v358 = vxor.u32 %v354, %v356
    %v359 = vadd.s32 %v357, 2147483648
    %v360 = vadd.s32 %v51, 2147483648
    %vm361 = vcmp.lt.s32.totalorder %v359, %v360
    %v362 = vadd.s32 %v358, 2147483648
    %v363 = vadd.s32 %v66, 2147483648
    %vm364 = vcmp.lt.s32.totalorder %v362, %v363
    %v365 = vsel %vm361, 1, 0
    %v366 = vsel %vm364, 1, 0
    %v367 = vcvt.s32.f32 %v365
    %v368 = vcvt.s32.f32 %v366
    %s369 = scalar_lea.vmem [#allocation7], 112
    %370 = vst [vmem:[%s369] sm:$0xff] %v367
    %371 = vst [vmem:[%s369 + $0x8] sm:$0xff] %v368
    // Predicated region
    $region10: #{tpu_custom_call.1} parent=1 // pred_check
      _
    $region11: #{tpu_custom_call.1} parent=1 // pred_check_branch
      %373 = sbr.rel (0) target = $region13
    $region12: #{tpu_custom_call.1} parent=1 // pred_region
      %375 = vsyncadd [#allocation6], 0
      %s376 = sshll.u32 [#allocation7], 4
      %s377 = int_to_ptr.vmem [resolvable:$true] %s376
      %s378 = sshll.u32 %s2, 4
      %s379 = int_to_ptr.hbm [resolvable:$true] %s378
      %384 = dma.vmem_to_hbm [thread:$0]  %s377, 2048, %s379, [#allocation6], 128, 128, 8
    $region13: #{tpu_custom_call.1} parent=1 // pred_fallthru
      _
    // Predicated region
    $region14: #{tpu_custom_call.1} parent=1 // pred_check
      _
    $region15: #{tpu_custom_call.1} parent=1 // pred_check_branch
      %386 = sbr.rel (0) target = $region17
    $region16: #{tpu_custom_call.1} parent=1 // pred_region
      %388 = dma.done [#allocation6], 2048
    $region17: #{tpu_custom_call.1} parent=1 // pred_fallthru
      _
    %389 = vsyncpa [#allocation5], 1
    %390 = vsyncpa [#allocation6], 1

</llo_original>
